<compile_context>
chip_gen: v5e
topology: v5e:2x2
jax: 0.10.0
libtpu: 0.0.40
codegen_flags: <defaults>
</compile_context>

<pallas_src>
import jax
import jax.numpy as jnp
import numpy as np
from jax.experimental import pallas as pl
from jax.experimental.pallas import tpu as pltpu


def pos_process_kernel(x_ref, gw_ref, whh_ref, b_ref,
                       projw_ref, projb_ref, v_ref, out_ref):
    # x_ref:    (B, Lc, K*E)   im2col-ed positions (built host-side)
    # gw_ref:   (4, K*E, H)    folded conv+LSTM input weights, per gate (i,f,g,o)
    # whh_ref:  (4, H,   H)    LSTM hidden weights, per gate
    # b_ref:    (4, 1,   H)    folded biases, per gate
    # projw_ref:(H, A), projb_ref:(1, A), v_ref:(1, A)
    # out_ref:  (B, H)
    B, Lc, KE = x_ref.shape
    H = whh_ref.shape[1]

    # Hoist all weight loads out of the (unrolled) recurrence.
    gw = [gw_ref[g] for g in range(4)]
    whh = [whh_ref[g] for g in range(4)]
    b = [b_ref[g] for g in range(4)]
    projw = projw_ref[...]
    projb = projb_ref[...]
    v = v_ref[...]

    h = jnp.zeros((Lc, H), jnp.float32)
    c = jnp.zeros((Lc, H), jnp.float32)

    # Recurrence over axis 0 (= B); Lc is the LSTM "batch" axis (see header).
    for t in range(B):                                     # B small & static: unrolled
        x_t = x_ref[t]                                     # (Lc, K*E)
        # Four per-gate matmuls (same MXU cost as one fused (.,4H) matmul at
        # this size, but no post-matmul lane slicing on the critical path).
        pre = [jnp.dot(x_t, gw[g], preferred_element_type=jnp.float32)
               + jnp.dot(h, whh[g], preferred_element_type=jnp.float32)
               + b[g]
               for g in range(4)]                          # each (Lc, H)
        i_g = jax.nn.sigmoid(pre[0])
        f_g = jax.nn.sigmoid(pre[1])
        g_g = jnp.tanh(pre[2])
        o_g = jax.nn.sigmoid(pre[3])
        c = f_g * c + i_g * g_g
        h = o_g * jnp.tanh(c)

        # AttentionPooling fused into this step (mask is None in this path):
        # batch element t only attends over this step's h across Lc.
        xp = jnp.tanh(jnp.dot(h, projw, preferred_element_type=jnp.float32)
                      + projb)                             # (Lc, A)
        scores = jnp.sum(xp * v, axis=-1, keepdims=True)   # (Lc, 1)
        m = jnp.max(scores, axis=0, keepdims=True)         # (1, 1)
        e = jnp.exp(scores - m)                            # (Lc, 1)
        w = e / jnp.sum(e, axis=0, keepdims=True)          # exact softmax
        out_ref[pl.ds(t, 1), :] = jnp.sum(h * w, axis=0, keepdims=True)  # (1, H)


def pos_process_forward(pos, kernel_params):
    """pos: (B, L, E) float32; kernel_params from fold_params()."""
    gw_stack, whh_stack, b_stack, proj_w_t, proj_b, v_row = kernel_params
    B, L, E = pos.shape
    KE = gw_stack.shape[1]
    K = KE // E
    Lc = L - K + 1
    H = whh_stack.shape[1]

    # Host-side im2col (layout plumbing kept outside the kernel):
    # x[b, t, k*E + e] = pos[b, t + k, e]
    x = jnp.concatenate([pos[:, k:k + Lc, :] for k in range(K)], axis=-1)  # (B,Lc,K*E)

    n_in = 1 + len(kernel_params)
    return pl.pallas_call(
        pos_process_kernel,
        out_shape=jax.ShapeDtypeStruct((B, H), jnp.float32),
        in_specs=[pl.BlockSpec(memory_space=pltpu.MemorySpace.VMEM)
                  for _ in range(n_in)],
        out_specs=pl.BlockSpec(memory_space=pltpu.MemorySpace.VMEM),
    )(x, gw_stack, whh_stack, b_stack, proj_w_t, proj_b, v_row)


def init_params(key, E, Cout, K, H, A):
    """Raw (unfolded) parameters matching the PyTorch module layout."""
    keys = jax.random.split(key, 5)

    # Conv1d: weight (Cout, E, K) kaiming-uniform (relu), bias zeros.
    bound = float(np.sqrt(6.0 / (E * K)))
    conv_w = jax.random.uniform(keys[0], (Cout, E, K), jnp.float32, -bound, bound)
    conv_w_mat = jnp.transpose(conv_w, (2, 1, 0)).reshape(K * E, Cout)  # (K*E, Cout)
    conv_b = jnp.zeros((1, Cout), jnp.float32)

    # LSTM: weight_ih (4H, Cout) xavier-uniform, weight_hh (4H, H), biases zero.
    b_ih = float(np.sqrt(6.0 / (4 * H + Cout)))
    w_ih = jax.random.uniform(keys[1], (4 * H, Cout), jnp.float32, -b_ih, b_ih)
    w_hh = 0.3 * jax.random.normal(keys[2], (4 * H, H), jnp.float32)
    # TODO(synk): nn.init.orthogonal_ for weight_hh not replicated exactly; a
    # deterministic scaled-normal stand-in is used (synthetic init).
    w_ih_all = jnp.transpose(w_ih)                         # (Cout, 4H), gates i,f,g,o
    w_hh_all = jnp.transpose(w_hh)                         # (H, 4H)
    b_all = jnp.zeros((1, 4 * H), jnp.float32)             # bias_ih + bias_hh, zero

    # AttentionPooling: proj weight (A, H) xavier-uniform, bias zeros, v ~ N(0, 0.1).
    b_p = float(np.sqrt(6.0 / (H + A)))
    proj_w = jax.random.uniform(keys[3], (A, H), jnp.float32, -b_p, b_p)
    proj_w_t = jnp.transpose(proj_w)                       # (H, A)
    proj_b = jnp.zeros((1, A), jnp.float32)
    v_row = 0.1 * jax.random.normal(keys[4], (1, A), jnp.float32)

    return (conv_w_mat, conv_b, w_ih_all, w_hh_all, b_all,
            proj_w_t, proj_b, v_row)


def fold_params(params):
    """Host-side: fold conv into LSTM input weights and split per gate."""
    (conv_w_mat, conv_b, w_ih_all, w_hh_all, b_all,
     proj_w_t, proj_b, v_row) = params
    H = w_hh_all.shape[0]

    gates_w = conv_w_mat @ w_ih_all                        # (K*E, 4H)  exact fold
    gates_b = conv_b @ w_ih_all + b_all                    # (1, 4H)

    gw_stack = jnp.stack([gates_w[:, g * H:(g + 1) * H] for g in range(4)], 0)   # (4,K*E,H)
    whh_stack = jnp.stack([w_hh_all[:, g * H:(g + 1) * H] for g in range(4)], 0)  # (4,H,H)
    b_stack = jnp.stack([gates_b[:, g * H:(g + 1) * H] for g in range(4)], 0)     # (4,1,H)
    return gw_stack, whh_stack, b_stack, proj_w_t, proj_b, v_row


def reference_forward(pos, params):
    """Pure-JAX reference using the raw (unfolded) parameters."""
    (conv_w_mat, conv_b, w_ih_all, w_hh_all, b_all,
     proj_w_t, proj_b, v_row) = params
    B, L, E = pos.shape
    KE, Cout = conv_w_mat.shape
    K = KE // E
    H = w_hh_all.shape[0]
    Lc = L - K + 1

    x = jnp.concatenate([pos[:, k:k + Lc, :] for k in range(K)], axis=-1)
    conv = (x.reshape(B * Lc, K * E) @ conv_w_mat + conv_b).reshape(B, Lc, Cout)

    h = jnp.zeros((Lc, H), jnp.float32)
    c = jnp.zeros((Lc, H), jnp.float32)
    outs = []
    for t in range(B):
        gates = conv[t] @ w_ih_all + h @ w_hh_all + b_all
        i = jax.nn.sigmoid(gates[:, 0:H])
        f = jax.nn.sigmoid(gates[:, H:2 * H])
        g = jnp.tanh(gates[:, 2 * H:3 * H])
        o = jax.nn.sigmoid(gates[:, 3 * H:4 * H])
        c = f * c + i * g
        h = o * jnp.tanh(c)
        outs.append(h)
    lstm_out = jnp.stack(outs, 0)                          # (B, Lc, H)

    xp = jnp.tanh(lstm_out @ proj_w_t + proj_b)            # (B, Lc, A)
    scores = jnp.sum(xp * v_row, axis=-1)                  # (B, Lc)
    w = jax.nn.softmax(scores, axis=1)
    return jnp.sum(lstm_out * w[..., None], axis=1)        # (B, H)


if __name__ == "__main__":
    # args: embed_dim=8, conv_out_channels=16, kernal_size=3,
    #       lstm_hid_dim=16, att_hid_dim=16
    B, L, E = 2, 16, 8
    K, Cout, H, A = 3, 16, 16, 16

    key = jax.random.PRNGKey(0)
    k_pos, k_par = jax.random.split(key)
    pos = jax.random.normal(k_pos, (B, L, E), jnp.float32)
    params = init_params(k_par, E, Cout, K, H, A)
    kernel_params = fold_params(params)

    out = pos_process_forward(pos, kernel_params)
    out = jax.block_until_ready(out)

    ref = reference_forward(pos, params)
    np.testing.assert_allclose(np.asarray(out), np.asarray(ref),
                               rtol=1e-2, atol=1e-2)
    assert out.shape == (B, H)
    print("KERNEL_OK")
</pallas_src>

<mosaic_0001>
module attributes {stable_mosaic.version = 11 : i64} {
  func.func @pos_process_kernel(%arg0: memref<2x14x24xf32, #tpu.memory_space<vmem>>, %arg1: memref<4x24x16xf32, #tpu.memory_space<vmem>>, %arg2: memref<4x16x16xf32, #tpu.memory_space<vmem>>, %arg3: memref<4x1x16xf32, #tpu.memory_space<vmem>>, %arg4: memref<16x16xf32, #tpu.memory_space<vmem>>, %arg5: memref<1x16xf32, #tpu.memory_space<vmem>>, %arg6: memref<1x16xf32, #tpu.memory_space<vmem>>, %arg7: memref<2x16xf32, #tpu.memory_space<vmem>>) attributes {dimension_semantics = [], scalar_prefetch = 0 : i64, scratch_operands = 0 : i64, tpu.core_type = #tpu.core_type<tc>} {
    %c0 = arith.constant 0 : index
    %c0_0 = arith.constant 0 : index
    %c0_1 = arith.constant 0 : index
    %0 = vector.load %arg1[%c0, %c0_0, %c0_1] : memref<4x24x16xf32, #tpu.memory_space<vmem>>, vector<1x24x16xf32>
    %1 = vector.shape_cast %0 : vector<1x24x16xf32> to vector<24x16xf32>
    %c1 = arith.constant 1 : index
    %c0_2 = arith.constant 0 : index
    %c0_3 = arith.constant 0 : index
    %2 = vector.load %arg1[%c1, %c0_2, %c0_3] : memref<4x24x16xf32, #tpu.memory_space<vmem>>, vector<1x24x16xf32>
    %3 = vector.shape_cast %2 : vector<1x24x16xf32> to vector<24x16xf32>
    %c2 = arith.constant 2 : index
    %c0_4 = arith.constant 0 : index
    %c0_5 = arith.constant 0 : index
    %4 = vector.load %arg1[%c2, %c0_4, %c0_5] : memref<4x24x16xf32, #tpu.memory_space<vmem>>, vector<1x24x16xf32>
    %5 = vector.shape_cast %4 : vector<1x24x16xf32> to vector<24x16xf32>
    %c3 = arith.constant 3 : index
    %c0_6 = arith.constant 0 : index
    %c0_7 = arith.constant 0 : index
    %6 = vector.load %arg1[%c3, %c0_6, %c0_7] : memref<4x24x16xf32, #tpu.memory_space<vmem>>, vector<1x24x16xf32>
    %7 = vector.shape_cast %6 : vector<1x24x16xf32> to vector<24x16xf32>
    %c0_8 = arith.constant 0 : index
    %c0_9 = arith.constant 0 : index
    %c0_10 = arith.constant 0 : index
    %8 = vector.load %arg2[%c0_8, %c0_9, %c0_10] : memref<4x16x16xf32, #tpu.memory_space<vmem>>, vector<1x16x16xf32>
    %9 = vector.shape_cast %8 : vector<1x16x16xf32> to vector<16x16xf32>
    %c1_11 = arith.constant 1 : index
    %c0_12 = arith.constant 0 : index
    %c0_13 = arith.constant 0 : index
    %10 = vector.load %arg2[%c1_11, %c0_12, %c0_13] : memref<4x16x16xf32, #tpu.memory_space<vmem>>, vector<1x16x16xf32>
    %11 = vector.shape_cast %10 : vector<1x16x16xf32> to vector<16x16xf32>
    %c2_14 = arith.constant 2 : index
    %c0_15 = arith.constant 0 : index
    %c0_16 = arith.constant 0 : index
    %12 = vector.load %arg2[%c2_14, %c0_15, %c0_16] : memref<4x16x16xf32, #tpu.memory_space<vmem>>, vector<1x16x16xf32>
    %13 = vector.shape_cast %12 : vector<1x16x16xf32> to vector<16x16xf32>
    %c3_17 = arith.constant 3 : index
    %c0_18 = arith.constant 0 : index
    %c0_19 = arith.constant 0 : index
    %14 = vector.load %arg2[%c3_17, %c0_18, %c0_19] : memref<4x16x16xf32, #tpu.memory_space<vmem>>, vector<1x16x16xf32>
    %15 = vector.shape_cast %14 : vector<1x16x16xf32> to vector<16x16xf32>
    %c0_20 = arith.constant 0 : index
    %c0_21 = arith.constant 0 : index
    %c0_22 = arith.constant 0 : index
    %16 = vector.load %arg3[%c0_20, %c0_21, %c0_22] : memref<4x1x16xf32, #tpu.memory_space<vmem>>, vector<1x1x16xf32>
    %17 = vector.shape_cast %16 : vector<1x1x16xf32> to vector<1x16xf32>
    %c1_23 = arith.constant 1 : index
    %c0_24 = arith.constant 0 : index
    %c0_25 = arith.constant 0 : index
    %18 = vector.load %arg3[%c1_23, %c0_24, %c0_25] : memref<4x1x16xf32, #tpu.memory_space<vmem>>, vector<1x1x16xf32>
    %19 = vector.shape_cast %18 : vector<1x1x16xf32> to vector<1x16xf32>
    %c2_26 = arith.constant 2 : index
    %c0_27 = arith.constant 0 : index
    %c0_28 = arith.constant 0 : index
    %20 = vector.load %arg3[%c2_26, %c0_27, %c0_28] : memref<4x1x16xf32, #tpu.memory_space<vmem>>, vector<1x1x16xf32>
    %21 = vector.shape_cast %20 : vector<1x1x16xf32> to vector<1x16xf32>
    %c3_29 = arith.constant 3 : index
    %c0_30 = arith.constant 0 : index
    %c0_31 = arith.constant 0 : index
    %22 = vector.load %arg3[%c3_29, %c0_30, %c0_31] : memref<4x1x16xf32, #tpu.memory_space<vmem>>, vector<1x1x16xf32>
    %23 = vector.shape_cast %22 : vector<1x1x16xf32> to vector<1x16xf32>
    %c0_32 = arith.constant 0 : index
    %c0_33 = arith.constant 0 : index
    %24 = vector.load %arg4[%c0_32, %c0_33] : memref<16x16xf32, #tpu.memory_space<vmem>>, vector<16x16xf32>
    %c0_34 = arith.constant 0 : index
    %c0_35 = arith.constant 0 : index
    %25 = vector.load %arg5[%c0_34, %c0_35] : memref<1x16xf32, #tpu.memory_space<vmem>>, vector<1x16xf32>
    %c0_36 = arith.constant 0 : index
    %c0_37 = arith.constant 0 : index
    %26 = vector.load %arg6[%c0_36, %c0_37] : memref<1x16xf32, #tpu.memory_space<vmem>>, vector<1x16xf32>
    %cst = arith.constant 0.000000e+00 : f32
    %27 = vector.broadcast %cst : f32 to vector<14x16xf32>
    %cst_38 = arith.constant 0.000000e+00 : f32
    %28 = vector.broadcast %cst_38 : f32 to vector<14x16xf32>
    %c0_39 = arith.constant 0 : index
    %c0_40 = arith.constant 0 : index
    %c0_41 = arith.constant 0 : index
    %29 = vector.load %arg0[%c0_39, %c0_40, %c0_41] : memref<2x14x24xf32, #tpu.memory_space<vmem>>, vector<1x14x24xf32>
    %30 = vector.shape_cast %29 : vector<1x14x24xf32> to vector<14x24xf32>
    %cst_42 = arith.constant dense<0.000000e+00> : vector<14x16xf32>
    %31 = tpu.matmul %30, %1, %cst_42 {dimension_numbers = #tpu.dot_dimension_numbers<[1], [0], [0], [1], [0, 0, 1, 1], [], []>} : vector<14x24xf32>, vector<24x16xf32>, vector<14x16xf32> -> vector<14x16xf32>
    %cst_43 = arith.constant dense<0.000000e+00> : vector<14x16xf32>
    %32 = tpu.matmul %27, %9, %cst_43 {dimension_numbers = #tpu.dot_dimension_numbers<[1], [0], [0], [1], [0, 0, 1, 1], [], []>} : vector<14x16xf32>, vector<16x16xf32>, vector<14x16xf32> -> vector<14x16xf32>
    %33 = arith.addf %31, %32 : vector<14x16xf32>
    %34 = vector.broadcast %17 : vector<1x16xf32> to vector<14x16xf32>
    %35 = arith.addf %33, %34 : vector<14x16xf32>
    %cst_44 = arith.constant dense<0.000000e+00> : vector<14x16xf32>
    %36 = tpu.matmul %30, %3, %cst_44 {dimension_numbers = #tpu.dot_dimension_numbers<[1], [0], [0], [1], [0, 0, 1, 1], [], []>} : vector<14x24xf32>, vector<24x16xf32>, vector<14x16xf32> -> vector<14x16xf32>
    %cst_45 = arith.constant dense<0.000000e+00> : vector<14x16xf32>
    %37 = tpu.matmul %27, %11, %cst_45 {dimension_numbers = #tpu.dot_dimension_numbers<[1], [0], [0], [1], [0, 0, 1, 1], [], []>} : vector<14x16xf32>, vector<16x16xf32>, vector<14x16xf32> -> vector<14x16xf32>
    %38 = arith.addf %36, %37 : vector<14x16xf32>
    %39 = vector.broadcast %19 : vector<1x16xf32> to vector<14x16xf32>
    %40 = arith.addf %38, %39 : vector<14x16xf32>
    %cst_46 = arith.constant dense<0.000000e+00> : vector<14x16xf32>
    %41 = tpu.matmul %30, %5, %cst_46 {dimension_numbers = #tpu.dot_dimension_numbers<[1], [0], [0], [1], [0, 0, 1, 1], [], []>} : vector<14x24xf32>, vector<24x16xf32>, vector<14x16xf32> -> vector<14x16xf32>
    %cst_47 = arith.constant dense<0.000000e+00> : vector<14x16xf32>
    %42 = tpu.matmul %27, %13, %cst_47 {dimension_numbers = #tpu.dot_dimension_numbers<[1], [0], [0], [1], [0, 0, 1, 1], [], []>} : vector<14x16xf32>, vector<16x16xf32>, vector<14x16xf32> -> vector<14x16xf32>
    %43 = arith.addf %41, %42 : vector<14x16xf32>
    %44 = vector.broadcast %21 : vector<1x16xf32> to vector<14x16xf32>
    %45 = arith.addf %43, %44 : vector<14x16xf32>
    %cst_48 = arith.constant dense<0.000000e+00> : vector<14x16xf32>
    %46 = tpu.matmul %30, %7, %cst_48 {dimension_numbers = #tpu.dot_dimension_numbers<[1], [0], [0], [1], [0, 0, 1, 1], [], []>} : vector<14x24xf32>, vector<24x16xf32>, vector<14x16xf32> -> vector<14x16xf32>
    %cst_49 = arith.constant dense<0.000000e+00> : vector<14x16xf32>
    %47 = tpu.matmul %27, %15, %cst_49 {dimension_numbers = #tpu.dot_dimension_numbers<[1], [0], [0], [1], [0, 0, 1, 1], [], []>} : vector<14x16xf32>, vector<16x16xf32>, vector<14x16xf32> -> vector<14x16xf32>
    %48 = arith.addf %46, %47 : vector<14x16xf32>
    %49 = vector.broadcast %23 : vector<1x16xf32> to vector<14x16xf32>
    %50 = arith.addf %48, %49 : vector<14x16xf32>
    %51 = arith.negf %35 : vector<14x16xf32>
    %52 = math.exp %51 : vector<14x16xf32>
    %cst_50 = arith.constant 1.000000e+00 : f32
    %53 = vector.broadcast %cst_50 : f32 to vector<14x16xf32>
    %54 = arith.addf %53, %52 : vector<14x16xf32>
    %55 = arith.divf %53, %54 : vector<14x16xf32>
    %56 = arith.negf %40 : vector<14x16xf32>
    %57 = math.exp %56 : vector<14x16xf32>
    %cst_51 = arith.constant 1.000000e+00 : f32
    %58 = vector.broadcast %cst_51 : f32 to vector<14x16xf32>
    %59 = arith.addf %58, %57 : vector<14x16xf32>
    %60 = arith.divf %58, %59 : vector<14x16xf32>
    %61 = math.tanh %45 : vector<14x16xf32>
    %62 = arith.negf %50 : vector<14x16xf32>
    %63 = math.exp %62 : vector<14x16xf32>
    %cst_52 = arith.constant 1.000000e+00 : f32
    %64 = vector.broadcast %cst_52 : f32 to vector<14x16xf32>
    %65 = arith.addf %64, %63 : vector<14x16xf32>
    %66 = arith.divf %64, %65 : vector<14x16xf32>
    %67 = arith.mulf %60, %28 : vector<14x16xf32>
    %68 = arith.mulf %55, %61 : vector<14x16xf32>
    %69 = arith.addf %67, %68 : vector<14x16xf32>
    %70 = math.tanh %69 : vector<14x16xf32>
    %71 = arith.mulf %66, %70 : vector<14x16xf32>
    %cst_53 = arith.constant dense<0.000000e+00> : vector<14x16xf32>
    %72 = tpu.matmul %71, %24, %cst_53 {dimension_numbers = #tpu.dot_dimension_numbers<[1], [0], [0], [1], [0, 0, 1, 1], [], []>} : vector<14x16xf32>, vector<16x16xf32>, vector<14x16xf32> -> vector<14x16xf32>
    %73 = vector.broadcast %25 : vector<1x16xf32> to vector<14x16xf32>
    %74 = arith.addf %72, %73 : vector<14x16xf32>
    %75 = math.tanh %74 : vector<14x16xf32>
    %76 = vector.broadcast %26 : vector<1x16xf32> to vector<14x16xf32>
    %77 = arith.mulf %75, %76 : vector<14x16xf32>
    %cst_54 = arith.constant dense<0.000000e+00> : vector<14xf32>
    %78 = vector.multi_reduction <add>, %77, %cst_54 [1] : vector<14x16xf32> to vector<14xf32>
    %79 = vector.shape_cast %78 : vector<14xf32> to vector<14x1xf32>
    %cst_55 = arith.constant dense<0xFF800000> : vector<1xf32>
    %80 = vector.multi_reduction <maximumf>, %79, %cst_55 [0] : vector<14x1xf32> to vector<1xf32>
    %81 = vector.shape_cast %80 : vector<1xf32> to vector<1x1xf32>
    %82 = vector.broadcast %81 : vector<1x1xf32> to vector<14x1xf32>
    %83 = arith.subf %79, %82 : vector<14x1xf32>
    %84 = math.exp %83 : vector<14x1xf32>
    %cst_56 = arith.constant dense<0.000000e+00> : vector<1xf32>
    %85 = vector.multi_reduction <add>, %84, %cst_56 [0] : vector<14x1xf32> to vector<1xf32>
    %86 = vector.shape_cast %85 : vector<1xf32> to vector<1x1xf32>
    %87 = vector.broadcast %86 : vector<1x1xf32> to vector<14x1xf32>
    %88 = arith.divf %84, %87 : vector<14x1xf32>
    %89 = vector.broadcast %88 : vector<14x1xf32> to vector<14x16xf32>
    %90 = arith.mulf %71, %89 : vector<14x16xf32>
    %cst_57 = arith.constant dense<0.000000e+00> : vector<16xf32>
    %91 = vector.multi_reduction <add>, %90, %cst_57 [0] : vector<14x16xf32> to vector<16xf32>
    %92 = vector.shape_cast %91 : vector<16xf32> to vector<1x16xf32>
    %c0_58 = arith.constant 0 : index
    %c0_59 = arith.constant 0 : index
    %93 = vector.load %arg7[%c0_58, %c0_59] : memref<2x16xf32, #tpu.memory_space<vmem>>, vector<1x16xf32>
    tpu.vector_store %arg7[%c0_58, %c0_59], %92 {strides = array<i32>} : memref<2x16xf32, #tpu.memory_space<vmem>>, vector<1x16xf32>,
    %c1_60 = arith.constant 1 : index
    %c0_61 = arith.constant 0 : index
    %c0_62 = arith.constant 0 : index
    %94 = vector.load %arg0[%c1_60, %c0_61, %c0_62] : memref<2x14x24xf32, #tpu.memory_space<vmem>>, vector<1x14x24xf32>
    %95 = vector.shape_cast %94 : vector<1x14x24xf32> to vector<14x24xf32>
    %cst_63 = arith.constant dense<0.000000e+00> : vector<14x16xf32>
    %96 = tpu.matmul %95, %1, %cst_63 {dimension_numbers = #tpu.dot_dimension_numbers<[1], [0], [0], [1], [0, 0, 1, 1], [], []>} : vector<14x24xf32>, vector<24x16xf32>, vector<14x16xf32> -> vector<14x16xf32>
    %cst_64 = arith.constant dense<0.000000e+00> : vector<14x16xf32>
    %97 = tpu.matmul %71, %9, %cst_64 {dimension_numbers = #tpu.dot_dimension_numbers<[1], [0], [0], [1], [0, 0, 1, 1], [], []>} : vector<14x16xf32>, vector<16x16xf32>, vector<14x16xf32> -> vector<14x16xf32>
    %98 = arith.addf %96, %97 : vector<14x16xf32>
    %99 = vector.broadcast %17 : vector<1x16xf32> to vector<14x16xf32>
    %100 = arith.addf %98, %99 : vector<14x16xf32>
    %cst_65 = arith.constant dense<0.000000e+00> : vector<14x16xf32>
    %101 = tpu.matmul %95, %3, %cst_65 {dimension_numbers = #tpu.dot_dimension_numbers<[1], [0], [0], [1], [0, 0, 1, 1], [], []>} : vector<14x24xf32>, vector<24x16xf32>, vector<14x16xf32> -> vector<14x16xf32>
    %cst_66 = arith.constant dense<0.000000e+00> : vector<14x16xf32>
    %102 = tpu.matmul %71, %11, %cst_66 {dimension_numbers = #tpu.dot_dimension_numbers<[1], [0], [0], [1], [0, 0, 1, 1], [], []>} : vector<14x16xf32>, vector<16x16xf32>, vector<14x16xf32> -> vector<14x16xf32>
    %103 = arith.addf %101, %102 : vector<14x16xf32>
    %104 = vector.broadcast %19 : vector<1x16xf32> to vector<14x16xf32>
    %105 = arith.addf %103, %104 : vector<14x16xf32>
    %cst_67 = arith.constant dense<0.000000e+00> : vector<14x16xf32>
    %106 = tpu.matmul %95, %5, %cst_67 {dimension_numbers = #tpu.dot_dimension_numbers<[1], [0], [0], [1], [0, 0, 1, 1], [], []>} : vector<14x24xf32>, vector<24x16xf32>, vector<14x16xf32> -> vector<14x16xf32>
    %cst_68 = arith.constant dense<0.000000e+00> : vector<14x16xf32>
    %107 = tpu.matmul %71, %13, %cst_68 {dimension_numbers = #tpu.dot_dimension_numbers<[1], [0], [0], [1], [0, 0, 1, 1], [], []>} : vector<14x16xf32>, vector<16x16xf32>, vector<14x16xf32> -> vector<14x16xf32>
    %108 = arith.addf %106, %107 : vector<14x16xf32>
    %109 = vector.broadcast %21 : vector<1x16xf32> to vector<14x16xf32>
    %110 = arith.addf %108, %109 : vector<14x16xf32>
    %cst_69 = arith.constant dense<0.000000e+00> : vector<14x16xf32>
    %111 = tpu.matmul %95, %7, %cst_69 {dimension_numbers = #tpu.dot_dimension_numbers<[1], [0], [0], [1], [0, 0, 1, 1], [], []>} : vector<14x24xf32>, vector<24x16xf32>, vector<14x16xf32> -> vector<14x16xf32>
    %cst_70 = arith.constant dense<0.000000e+00> : vector<14x16xf32>
    %112 = tpu.matmul %71, %15, %cst_70 {dimension_numbers = #tpu.dot_dimension_numbers<[1], [0], [0], [1], [0, 0, 1, 1], [], []>} : vector<14x16xf32>, vector<16x16xf32>, vector<14x16xf32> -> vector<14x16xf32>
    %113 = arith.addf %111, %112 : vector<14x16xf32>
    %114 = vector.broadcast %23 : vector<1x16xf32> to vector<14x16xf32>
    %115 = arith.addf %113, %114 : vector<14x16xf32>
    %116 = arith.negf %100 : vector<14x16xf32>
    %117 = math.exp %116 : vector<14x16xf32>
    %cst_71 = arith.constant 1.000000e+00 : f32
    %118 = vector.broadcast %cst_71 : f32 to vector<14x16xf32>
    %119 = arith.addf %118, %117 : vector<14x16xf32>
    %120 = arith.divf %118, %119 : vector<14x16xf32>
    %121 = arith.negf %105 : vector<14x16xf32>
    %122 = math.exp %121 : vector<14x16xf32>
    %cst_72 = arith.constant 1.000000e+00 : f32
    %123 = vector.broadcast %cst_72 : f32 to vector<14x16xf32>
    %124 = arith.addf %123, %122 : vector<14x16xf32>
    %125 = arith.divf %123, %124 : vector<14x16xf32>
    %126 = math.tanh %110 : vector<14x16xf32>
    %127 = arith.negf %115 : vector<14x16xf32>
    %128 = math.exp %127 : vector<14x16xf32>
    %cst_73 = arith.constant 1.000000e+00 : f32
    %129 = vector.broadcast %cst_73 : f32 to vector<14x16xf32>
    %130 = arith.addf %129, %128 : vector<14x16xf32>
    %131 = arith.divf %129, %130 : vector<14x16xf32>
    %132 = arith.mulf %125, %69 : vector<14x16xf32>
    %133 = arith.mulf %120, %126 : vector<14x16xf32>
    %134 = arith.addf %132, %133 : vector<14x16xf32>
    %135 = math.tanh %134 : vector<14x16xf32>
    %136 = arith.mulf %131, %135 : vector<14x16xf32>
    %cst_74 = arith.constant dense<0.000000e+00> : vector<14x16xf32>
    %137 = tpu.matmul %136, %24, %cst_74 {dimension_numbers = #tpu.dot_dimension_numbers<[1], [0], [0], [1], [0, 0, 1, 1], [], []>} : vector<14x16xf32>, vector<16x16xf32>, vector<14x16xf32> -> vector<14x16xf32>
    %138 = vector.broadcast %25 : vector<1x16xf32> to vector<14x16xf32>
    %139 = arith.addf %137, %138 : vector<14x16xf32>
    %140 = math.tanh %139 : vector<14x16xf32>
    %141 = vector.broadcast %26 : vector<1x16xf32> to vector<14x16xf32>
    %142 = arith.mulf %140, %141 : vector<14x16xf32>
    %cst_75 = arith.constant dense<0.000000e+00> : vector<14xf32>
    %143 = vector.multi_reduction <add>, %142, %cst_75 [1] : vector<14x16xf32> to vector<14xf32>
    %144 = vector.shape_cast %143 : vector<14xf32> to vector<14x1xf32>
    %cst_76 = arith.constant dense<0xFF800000> : vector<1xf32>
    %145 = vector.multi_reduction <maximumf>, %144, %cst_76 [0] : vector<14x1xf32> to vector<1xf32>
    %146 = vector.shape_cast %145 : vector<1xf32> to vector<1x1xf32>
    %147 = vector.broadcast %146 : vector<1x1xf32> to vector<14x1xf32>
    %148 = arith.subf %144, %147 : vector<14x1xf32>
    %149 = math.exp %148 : vector<14x1xf32>
    %cst_77 = arith.constant dense<0.000000e+00> : vector<1xf32>
    %150 = vector.multi_reduction <add>, %149, %cst_77 [0] : vector<14x1xf32> to vector<1xf32>
    %151 = vector.shape_cast %150 : vector<1xf32> to vector<1x1xf32>
    %152 = vector.broadcast %151 : vector<1x1xf32> to vector<14x1xf32>
    %153 = arith.divf %149, %152 : vector<14x1xf32>
    %154 = vector.broadcast %153 : vector<14x1xf32> to vector<14x16xf32>
    %155 = arith.mulf %136, %154 : vector<14x16xf32>
    %cst_78 = arith.constant dense<0.000000e+00> : vector<16xf32>
    %156 = vector.multi_reduction <add>, %155, %cst_78 [0] : vector<14x16xf32> to vector<16xf32>
    %157 = vector.shape_cast %156 : vector<16xf32> to vector<1x16xf32>
    %c1_79 = arith.constant 1 : index
    %c0_80 = arith.constant 0 : index
    %158 = vector.load %arg7[%c1_79, %c0_80] : memref<2x16xf32, #tpu.memory_space<vmem>>, vector<1x16xf32>
    tpu.vector_store %arg7[%c1_79, %c0_80], %157 {strides = array<i32>} : memref<2x16xf32, #tpu.memory_space<vmem>>, vector<1x16xf32>,
    return
  }
}

</mosaic_0001>

<llo_original>
// kernel: tpu_custom_call.1
$region0: #{tpu_custom_call.1}
  #allocation0 [shape = 'u32[]', space=smem, size = 0x4, offset = 0x4, fixed_abs, tag = 'smem constant byte address 0x4 - core index']
  #allocation1 [shape = 'u32[72,128]{1,0:T(1,128)}', space=vmem, size = 0x9000, scoped, tag = 'internal scratch']
  %s0 = inlined_call_operand.vmem [shape: f32[2,14,24], index: 0, kind: input, shape index: {}]
  %s1 = inlined_call_operand.vmem [shape: f32[4,24,16], index: 1, kind: input, shape index: {}]
  %s2 = inlined_call_operand.vmem [shape: f32[4,16,16], index: 2, kind: input, shape index: {}]
  %s3 = inlined_call_operand.vmem [shape: f32[4,1,16], index: 3, kind: input, shape index: {}]
  %s4 = inlined_call_operand.vmem [shape: f32[16,16], index: 4, kind: input, shape index: {}]
  %s5 = inlined_call_operand.vmem [shape: f32[1,16], index: 5, kind: input, shape index: {}]
  %s6 = inlined_call_operand.vmem [shape: f32[1,16], index: 6, kind: input, shape index: {}]
  %s7 = inlined_call_operand.hbm [shape: f32[2,16], index: 7, kind: output, shape index: {}]
  %s8 = sld [smem:[#allocation0]]
  $region38: #{tpu_custom_call.1} parent=0
    _
  %s10 = ssub.s32 1, %s8
  %s11 = scalar_select 0, %s10, %s8
  $region1: #{tpu_custom_call.1} parent=0
    #allocation2 [shape = 'u8[1024]{0}', space=vmem, size = 0x400, scoped, tag = 'output window, operand 0, single buffered']
    #allocation3 [shape = 's32[1]{0}', space=sflag, size = 0x4, scoped, tag = 'scoped memory for tpu_custom_call.1']
    %12 = vsyncpa [#allocation3], 0
    // Predicated region
    $region2: #{tpu_custom_call.1} parent=1 // pred_check
      _
    $region3: #{tpu_custom_call.1} parent=1 // pred_check_branch
      %14 = sbr.rel (0) target = $region5
    $region4: #{tpu_custom_call.1} parent=1 // pred_region
      _
    $region5: #{tpu_custom_call.1} parent=1 // pred_fallthru
      _
    // Predicated region
    $region6: #{tpu_custom_call.1} parent=1 // pred_check
      _
    $region7: #{tpu_custom_call.1} parent=1 // pred_check_branch
      %16 = sbr.rel (0) target = $region9
    $region8: #{tpu_custom_call.1} parent=1 // pred_region
      _
    $region9: #{tpu_custom_call.1} parent=1 // pred_fallthru
      _
    // Predicated region
    $region10: #{tpu_custom_call.1} parent=1 // pred_check
      _
    $region11: #{tpu_custom_call.1} parent=1 // pred_check_branch
      %18 = sbr.rel (0) target = $region13
    $region12: #{tpu_custom_call.1} parent=1 // pred_region
      _
    $region13: #{tpu_custom_call.1} parent=1 // pred_fallthru
      _
    // Predicated region
    $region14: #{tpu_custom_call.1} parent=1 // pred_check
      _
    $region15: #{tpu_custom_call.1} parent=1 // pred_check_branch
      %20 = sbr.rel (0) target = $region17
    $region16: #{tpu_custom_call.1} parent=1 // pred_region
      _
    $region17: #{tpu_custom_call.1} parent=1 // pred_fallthru
      _
    // Predicated region
    $region18: #{tpu_custom_call.1} parent=1 // pred_check
      _
    $region19: #{tpu_custom_call.1} parent=1 // pred_check_branch
      %22 = sbr.rel (0) target = $region21
    $region20: #{tpu_custom_call.1} parent=1 // pred_region
      _
    $region21: #{tpu_custom_call.1} parent=1 // pred_fallthru
      _
    // Predicated region
    $region22: #{tpu_custom_call.1} parent=1 // pred_check
      _
    $region23: #{tpu_custom_call.1} parent=1 // pred_check_branch
      %24 = sbr.rel (0) target = $region25
    $region24: #{tpu_custom_call.1} parent=1 // pred_region
      _
    $region25: #{tpu_custom_call.1} parent=1 // pred_fallthru
      _
    // Predicated region
    $region26: #{tpu_custom_call.1} parent=1 // pred_check
      _
    $region27: #{tpu_custom_call.1} parent=1 // pred_check_branch
      %26 = sbr.rel (0) target = $region29
    $region28: #{tpu_custom_call.1} parent=1 // pred_region
      _
    $region29: #{tpu_custom_call.1} parent=1 // pred_fallthru
      _
    %v27 = vld [vmem:[%s1] sm:$0xff]
    %v28 = vld [vmem:[%s1 + $0x8] sm:$0xff]
    %v29 = vld [vmem:[%s1 + $0x10] sm:$0xff]
    %s30 = scalar_lea.vmem %s1, 24
    %v31 = vld [vmem:[%s30] sm:$0xff]
    %v32 = vld [vmem:[%s30 + $0x8] sm:$0xff]
    %v33 = vld [vmem:[%s30 + $0x10] sm:$0xff]
    %s34 = scalar_lea.vmem %s1, 48
    %v35 = vld [vmem:[%s34] sm:$0xff]
    %v36 = vld [vmem:[%s34 + $0x8] sm:$0xff]
    %v37 = vld [vmem:[%s34 + $0x10] sm:$0xff]
    %s38 = scalar_lea.vmem %s1, 72
    %v39 = vld [vmem:[%s38] sm:$0xff]
    %v40 = vld [vmem:[%s38 + $0x8] sm:$0xff]
    %v41 = vld [vmem:[%s38 + $0x10] sm:$0xff]
    %v42 = vld [vmem:[%s2] sm:$0xff]
    %v43 = vld [vmem:[%s2 + $0x8] sm:$0xff]
    %s44 = scalar_lea.vmem %s2, 16
    %v45 = vld [vmem:[%s44] sm:$0xff]
    %v46 = vld [vmem:[%s44 + $0x8] sm:$0xff]
    %s47 = scalar_lea.vmem %s2, 32
    %v48 = vld [vmem:[%s47] sm:$0xff]
    %v49 = vld [vmem:[%s47 + $0x8] sm:$0xff]
    %s50 = scalar_lea.vmem %s2, 48
    %v51 = vld [vmem:[%s50] sm:$0xff]
    %v52 = vld [vmem:[%s50 + $0x8] sm:$0xff]
    %v53 = vld [vmem:[%s3] sm:$0x1]
    %s54 = scalar_lea.vmem %s3, 1
    %v55 = vld [vmem:[%s54] sm:$0x1]
    %s56 = scalar_lea.vmem %s3, 2
    %v57 = vld [vmem:[%s56] sm:$0x1]
    %s58 = scalar_lea.vmem %s3, 3
    %v59 = vld [vmem:[%s58] sm:$0x1]
    %v60 = vld [vmem:[%s4] sm:$0xff]
    %v61 = vld [vmem:[%s4 + $0x8] sm:$0xff]
    %v62 = vld [vmem:[%s5] sm:$0x1]
    %v63 = vld [vmem:[%s6] sm:$0x1]
    %v64 = vld [vmem:[%s0] sm:$0xff]
    %v65 = vld [vmem:[%s0 + $0x8] sm:$0x3f]
    %vm66 = vcmask 130048
    %v68 = vsel %vm66, 0.0, 0
    %70 = vmatpush.msra.mxu0 0.0
    %71 = vmatpush.msra.mxu0 0.0
    %72 = vmatpush.msra.mxu0 0.0
    %73 = vmatpush.msra.mxu0 0.0
    %74 = vmatpush.msra.mxu0 0.0
    %75 = vmatpush.msra.mxu0 0.0
    %76 = vmatpush.msra.mxu0 0.0
    %77 = vmatpush.msra.mxu0 0.0
    %78 = vmatpush.msra.mxu0 0.0
    %79 = vmatpush.msra.mxu0 0.0
    %80 = vmatpush.msra.mxu0 0.0
    %81 = vmatpush.msra.mxu0 0.0
    %82 = vmatpush.msra.mxu0 0.0
    %83 = vmatpush.msra.mxu0 0.0
    %84 = vmatpush.msra.mxu0 %v43
    %85 = vmatpush.msra.mxu0 %v42
    %86 = vmatmul.f32.gmra.mxu0 %v68
    %v87 = vpop.f32.mrf.mxu0
    %v88 = vadd.f32 0.0, %v87
    %89 = vmatmul.f32.gmra.mxu0 %v68
    %v90 = vpop.f32.mrf.mxu0
    %v91 = vadd.f32 0.0, %v90
    %92 = vdwg.mxu0
    %vm93 = vcmask 195584
    %v95 = vsel %vm93, %v64, 0
    %v98 = vsel %vm93, %v65, 0
    %100 = vmatpush.msra.mxu0 0.0
    %101 = vmatpush.msra.mxu0 0.0
    %102 = vmatpush.msra.mxu0 0.0
    %103 = vmatpush.msra.mxu0 0.0
    %104 = vmatpush.msra.mxu0 0.0
    %105 = vmatpush.msra.mxu0 0.0
    %106 = vmatpush.msra.mxu0 0.0
    %107 = vmatpush.msra.mxu0 0.0
    %108 = vmatpush.msra.mxu0 0.0
    %109 = vmatpush.msra.mxu0 0.0
    %110 = vmatpush.msra.mxu0 0.0
    %111 = vmatpush.msra.mxu0 0.0
    %112 = vmatpush.msra.mxu0 0.0
    %113 = vmatpush.msra.mxu0 %v29
    %114 = vmatpush.msra.mxu0 %v28
    %115 = vmatpush.msra.mxu0 %v27
    %116 = vmatmul.f32.gmra.mxu0 %v95
    %v117 = vpop.f32.mrf.mxu0
    %v118 = vadd.f32 %v88, %v117
    %119 = vmatmul.f32.gmra.mxu0 %v98
    %v120 = vpop.f32.mrf.mxu0
    %v121 = vadd.f32 %v91, %v120
    %122 = vdwg.mxu0
    %v124 = vperm.slane %v53, 0
    %v126 = vadd.f32 %v118, %v124
    %v127 = vadd.f32 %v121, %v124
    %128 = vmatpush.msra.mxu0 0.0
    %129 = vmatpush.msra.mxu0 0.0
    %130 = vmatpush.msra.mxu0 0.0
    %131 = vmatpush.msra.mxu0 0.0
    %132 = vmatpush.msra.mxu0 0.0
    %133 = vmatpush.msra.mxu0 0.0
    %134 = vmatpush.msra.mxu0 0.0
    %135 = vmatpush.msra.mxu0 0.0
    %136 = vmatpush.msra.mxu0 0.0
    %137 = vmatpush.msra.mxu0 0.0
    %138 = vmatpush.msra.mxu0 0.0
    %139 = vmatpush.msra.mxu0 0.0
    %140 = vmatpush.msra.mxu0 0.0
    %141 = vmatpush.msra.mxu0 0.0
    %142 = vmatpush.msra.mxu0 %v46
    %143 = vmatpush.msra.mxu0 %v45
    %144 = vmatmul.f32.gmra.mxu0 %v68
    %v145 = vpop.f32.mrf.mxu0
    %v146 = vadd.f32 0.0, %v145
    %147 = vmatmul.f32.gmra.mxu0 %v68
    %v148 = vpop.f32.mrf.mxu0
    %v149 = vadd.f32 0.0, %v148
    %150 = vdwg.mxu0
    %151 = vmatpush.msra.mxu0 0.0
    %152 = vmatpush.msra.mxu0 0.0
    %153 = vmatpush.msra.mxu0 0.0
    %154 = vmatpush.msra.mxu0 0.0
    %155 = vmatpush.msra.mxu0 0.0
    %156 = vmatpush.msra.mxu0 0.0
    %157 = vmatpush.msra.mxu0 0.0
    %158 = vmatpush.msra.mxu0 0.0
    %159 = vmatpush.msra.mxu0 0.0
    %160 = vmatpush.msra.mxu0 0.0
    %161 = vmatpush.msra.mxu0 0.0
    %162 = vmatpush.msra.mxu0 0.0
    %163 = vmatpush.msra.mxu0 0.0
    %164 = vmatpush.msra.mxu0 %v33
    %165 = vmatpush.msra.mxu0 %v32
    %166 = vmatpush.msra.mxu0 %v31
    %167 = vmatmul.f32.gmra.mxu0 %v95
    %v168 = vpop.f32.mrf.mxu0
    %v169 = vadd.f32 %v146, %v168
    %170 = vmatmul.f32.gmra.mxu0 %v98
    %v171 = vpop.f32.mrf.mxu0
    %v172 = vadd.f32 %v149, %v171
    %173 = vdwg.mxu0
    %v175 = vperm.slane %v55, 0
    %v177 = vadd.f32 %v169, %v175
    %v178 = vadd.f32 %v172, %v175
    %179 = vmatpush.msra.mxu0 0.0
    %180 = vmatpush.msra.mxu0 0.0
    %181 = vmatpush.msra.mxu0 0.0
    %182 = vmatpush.msra.mxu0 0.0
    %183 = vmatpush.msra.mxu0 0.0
    %184 = vmatpush.msra.mxu0 0.0
    %185 = vmatpush.msra.mxu0 0.0
    %186 = vmatpush.msra.mxu0 0.0
    %187 = vmatpush.msra.mxu0 0.0
    %188 = vmatpush.msra.mxu0 0.0
    %189 = vmatpush.msra.mxu0 0.0
    %190 = vmatpush.msra.mxu0 0.0
    %191 = vmatpush.msra.mxu0 0.0
    %192 = vmatpush.msra.mxu0 0.0
    %193 = vmatpush.msra.mxu0 %v49
    %194 = vmatpush.msra.mxu0 %v48
    %195 = vmatmul.f32.gmra.mxu0 %v68
    %v196 = vpop.f32.mrf.mxu0
    %v197 = vadd.f32 0.0, %v196
    %198 = vmatmul.f32.gmra.mxu0 %v68
    %v199 = vpop.f32.mrf.mxu0
    %v200 = vadd.f32 0.0, %v199
    %201 = vdwg.mxu0
    %202 = vmatpush.msra.mxu0 0.0
    %203 = vmatpush.msra.mxu0 0.0
    %204 = vmatpush.msra.mxu0 0.0
    %205 = vmatpush.msra.mxu0 0.0
    %206 = vmatpush.msra.mxu0 0.0
    %207 = vmatpush.msra.mxu0 0.0
    %208 = vmatpush.msra.mxu0 0.0
    %209 = vmatpush.msra.mxu0 0.0
    %210 = vmatpush.msra.mxu0 0.0
    %211 = vmatpush.msra.mxu0 0.0
    %212 = vmatpush.msra.mxu0 0.0
    %213 = vmatpush.msra.mxu0 0.0
    %214 = vmatpush.msra.mxu0 0.0
    %215 = vmatpush.msra.mxu0 %v37
    %216 = vmatpush.msra.mxu0 %v36
    %217 = vmatpush.msra.mxu0 %v35
    %218 = vmatmul.f32.gmra.mxu0 %v95
    %v219 = vpop.f32.mrf.mxu0
    %v220 = vadd.f32 %v197, %v219
    %221 = vmatmul.f32.gmra.mxu0 %v98
    %v222 = vpop.f32.mrf.mxu0
    %v223 = vadd.f32 %v200, %v222
    %224 = vdwg.mxu0
    %v226 = vperm.slane %v57, 0
    %v228 = vadd.f32 %v220, %v226
    %v229 = vadd.f32 %v223, %v226
    %230 = vmatpush.msra.mxu0 0.0
    %231 = vmatpush.msra.mxu0 0.0
    %232 = vmatpush.msra.mxu0 0.0
    %233 = vmatpush.msra.mxu0 0.0
    %234 = vmatpush.msra.mxu0 0.0
    %235 = vmatpush.msra.mxu0 0.0
    %236 = vmatpush.msra.mxu0 0.0
    %237 = vmatpush.msra.mxu0 0.0
    %238 = vmatpush.msra.mxu0 0.0
    %239 = vmatpush.msra.mxu0 0.0
    %240 = vmatpush.msra.mxu0 0.0
    %241 = vmatpush.msra.mxu0 0.0
    %242 = vmatpush.msra.mxu0 0.0
    %243 = vmatpush.msra.mxu0 0.0
    %244 = vmatpush.msra.mxu0 %v52
    %245 = vmatpush.msra.mxu0 %v51
    %246 = vmatmul.f32.gmra.mxu0 %v68
    %v247 = vpop.f32.mrf.mxu0
    %v248 = vadd.f32 0.0, %v247
    %249 = vmatmul.f32.gmra.mxu0 %v68
    %v250 = vpop.f32.mrf.mxu0
    %v251 = vadd.f32 0.0, %v250
    %252 = vdwg.mxu0
    %253 = vmatpush.msra.mxu0 0.0
    %254 = vmatpush.msra.mxu0 0.0
    %255 = vmatpush.msra.mxu0 0.0
    %256 = vmatpush.msra.mxu0 0.0
    %257 = vmatpush.msra.mxu0 0.0
    %258 = vmatpush.msra.mxu0 0.0
    %259 = vmatpush.msra.mxu0 0.0
    %260 = vmatpush.msra.mxu0 0.0
    %261 = vmatpush.msra.mxu0 0.0
    %262 = vmatpush.msra.mxu0 0.0
    %263 = vmatpush.msra.mxu0 0.0
    %264 = vmatpush.msra.mxu0 0.0
    %265 = vmatpush.msra.mxu0 0.0
    %266 = vmatpush.msra.mxu0 %v41
    %267 = vmatpush.msra.mxu0 %v40
    %268 = vmatpush.msra.mxu0 %v39
    %269 = vmatmul.f32.gmra.mxu0 %v95
    %v270 = vpop.f32.mrf.mxu0
    %v271 = vadd.f32 %v248, %v270
    %272 = vmatmul.f32.gmra.mxu0 %v98
    %v273 = vpop.f32.mrf.mxu0
    %v274 = vadd.f32 %v251, %v273
    %275 = vdwg.mxu0
    %v277 = vperm.slane %v59, 0
    %v279 = vadd.f32 %v271, %v277
    %v280 = vadd.f32 %v274, %v277
    %v281 = vxor.u32 %v126, 2147483648
    %v282 = vxor.u32 %v127, 2147483648
    %v283 = vmul.f32 %v281, 1.442695
    %v284 = vpow.pop %v283
    %v285 = vmul.f32 %v282, 1.442695
    %v286 = vpow.pop %v285
    %v287 = vadd.f32 %v284, 1.0
    %v288 = vadd.f32 %v286, 1.0
    %v289 = vrcp.pop %v287
    %v290 = vmul.f32 %v287, %v289
    %v291 = vsub.f32 1.0, %v290
    %v292 = vmul.f32 %v289, %v291
    %v293 = vadd.f32 %v289, %v292
    %vm294 = vweird.f32 %v287
    %vm295 = vweird.f32 %v289
    %vm296 = vmor %vm294, %vm295
    %v297 = vsel %vm296, %v289, %v293
    %v298 = vand.u32 2147483647, %v287
    %vm299 = vcmp.eq.f32.partialorder %v298, 8.507059e+37
    %v300 = vand.u32 %v287, 2147483648
    %v301 = vor.u32 1.1754944e-38, %v300
    %v302 = vsel %vm299, %v301, %v297
    %v303 = vmul.f32 1.0, %v302
    %v304 = vrcp.pop %v288
    %v305 = vmul.f32 %v288, %v304
    %v306 = vsub.f32 1.0, %v305
    %v307 = vmul.f32 %v304, %v306
    %v308 = vadd.f32 %v304, %v307
    %vm309 = vweird.f32 %v288
    %vm310 = vweird.f32 %v304
    %vm311 = vmor %vm309, %vm310
    %v312 = vsel %vm311, %v304, %v308
    %v313 = vand.u32 2147483647, %v288
    %vm314 = vcmp.eq.f32.partialorder %v313, 8.507059e+37
    %v315 = vand.u32 %v288, 2147483648
    %v316 = vor.u32 1.1754944e-38, %v315
    %v317 = vsel %vm314, %v316, %v312
    %v318 = vmul.f32 1.0, %v317
    %v319 = vxor.u32 %v177, 2147483648
    %v320 = vxor.u32 %v178, 2147483648
    %v321 = vmul.f32 %v319, 1.442695
    %v322 = vpow.pop %v321
    %v323 = vmul.f32 %v320, 1.442695
    %v324 = vpow.pop %v323
    %v325 = vadd.f32 %v322, 1.0
    %v326 = vadd.f32 %v324, 1.0
    %v327 = vrcp.pop %v325
    %v328 = vmul.f32 %v325, %v327
    %v329 = vsub.f32 1.0, %v328
    %v330 = vmul.f32 %v327, %v329
    %v331 = vadd.f32 %v327, %v330
    %vm332 = vweird.f32 %v325
    %vm333 = vweird.f32 %v327
    %vm334 = vmor %vm332, %vm333
    %v335 = vsel %vm334, %v327, %v331
    %v336 = vand.u32 2147483647, %v325
    %vm337 = vcmp.eq.f32.partialorder %v336, 8.507059e+37
    %v338 = vand.u32 %v325, 2147483648
    %v339 = vor.u32 1.1754944e-38, %v338
    %v340 = vsel %vm337, %v339, %v335
    %v341 = vmul.f32 1.0, %v340
    %v342 = vrcp.pop %v326
    %v343 = vmul.f32 %v326, %v342
    %v344 = vsub.f32 1.0, %v343
    %v345 = vmul.f32 %v342, %v344
    %v346 = vadd.f32 %v342, %v345
    %vm347 = vweird.f32 %v326
    %vm348 = vweird.f32 %v342
    %vm349 = vmor %vm347, %vm348
    %v350 = vsel %vm349, %v342, %v346
    %v351 = vand.u32 2147483647, %v326
    %vm352 = vcmp.eq.f32.partialorder %v351, 8.507059e+37
    %v353 = vand.u32 %v326, 2147483648
    %v354 = vor.u32 1.1754944e-38, %v353
    %v355 = vsel %vm352, %v354, %v350
    %v356 = vmul.f32 1.0, %v355
    %v357 = vtanh.pop %v228
    %v358 = vtanh.pop %v229
    %v359 = vxor.u32 %v279, 2147483648
    %v360 = vxor.u32 %v280, 2147483648
    %v361 = vmul.f32 %v359, 1.442695
    %v362 = vpow.pop %v361
    %v363 = vmul.f32 %v360, 1.442695
    %v364 = vpow.pop %v363
    %v365 = vadd.f32 %v362, 1.0
    %v366 = vadd.f32 %v364, 1.0
    %v367 = vrcp.pop %v365
    %v368 = vmul.f32 %v365, %v367
    %v369 = vsub.f32 1.0, %v368
    %v370 = vmul.f32 %v367, %v369
    %v371 = vadd.f32 %v367, %v370
    %vm372 = vweird.f32 %v365
    %vm373 = vweird.f32 %v367
    %vm374 = vmor %vm372, %vm373
    %v375 = vsel %vm374, %v367, %v371
    %v376 = vand.u32 2147483647, %v365
    %vm377 = vcmp.eq.f32.partialorder %v376, 8.507059e+37
    %v378 = vand.u32 %v365, 2147483648
    %v379 = vor.u32 1.1754944e-38, %v378
    %v380 = vsel %vm377, %v379, %v375
    %v381 = vmul.f32 1.0, %v380
    %v382 = vrcp.pop %v366
    %v383 = vmul.f32 %v366, %v382
    %v384 = vsub.f32 1.0, %v383
    %v385 = vmul.f32 %v382, %v384
    %v386 = vadd.f32 %v382, %v385
    %vm387 = vweird.f32 %v366
    %vm388 = vweird.f32 %v382
    %vm389 = vmor %vm387, %vm388
    %v390 = vsel %vm389, %v382, %v386
    %v391 = vand.u32 2147483647, %v366
    %vm392 = vcmp.eq.f32.partialorder %v391, 8.507059e+37
    %v393 = vand.u32 %v366, 2147483648
    %v394 = vor.u32 1.1754944e-38, %v393
    %v395 = vsel %vm392, %v394, %v390
    %v396 = vmul.f32 1.0, %v395
    %v397 = vmul.f32 %v341, 0.0
    %v398 = vmul.f32 %v356, 0.0
    %v399 = vmul.f32 %v303, %v357
    %v400 = vmul.f32 %v318, %v358
    %v401 = vadd.f32 %v397, %v399
    %v402 = vadd.f32 %v398, %v400
    %v403 = vtanh.pop %v401
    %v404 = vtanh.pop %v402
    %v405 = vmul.f32 %v381, %v403
    %v406 = vmul.f32 %v396, %v404
    %v408 = vperm.slane %v62, 0
    %v411 = vsel %vm66, %v405, 0
    %v414 = vsel %vm66, %v406, 0
    %416 = vmatpush.msra.mxu0 0.0
    %417 = vmatpush.msra.mxu0 0.0
    %418 = vmatpush.msra.mxu0 0.0
    %419 = vmatpush.msra.mxu0 0.0
    %420 = vmatpush.msra.mxu0 0.0
    %421 = vmatpush.msra.mxu0 0.0
    %422 = vmatpush.msra.mxu0 0.0
    %423 = vmatpush.msra.mxu0 0.0
    %424 = vmatpush.msra.mxu0 0.0
    %425 = vmatpush.msra.mxu0 0.0
    %426 = vmatpush.msra.mxu0 0.0
    %427 = vmatpush.msra.mxu0 0.0
    %428 = vmatpush.msra.mxu0 0.0
    %429 = vmatpush.msra.mxu0 0.0
    %430 = vmatpush.msra.mxu0 %v61
    %431 = vmatpush.msra.mxu0 %v60
    %432 = vmatmul.f32.gmra.mxu0 %v411
    %v433 = vpop.f32.mrf.mxu0
    %v434 = vadd.f32 %v408, %v433
    %435 = vmatmul.f32.gmra.mxu0 %v414
    %v436 = vpop.f32.mrf.mxu0
    %v437 = vadd.f32 %v408, %v436
    %438 = vdwg.mxu0
    %v439 = vtanh.pop %v434
    %v440 = vtanh.pop %v437
    %v442 = vperm.slane %v63, 0
    %v444 = vmul.f32 %v439, %v442
    %v445 = vmul.f32 %v440, %v442
    %v446 = vsel %vm66, %v444, 0.0
    %447 = vadd.xlane.f32.xlu0 %v446
    %v448 = vpop.xlane.xlu0 %447
    %vm449 = vcmask 128000
    %v450 = vsel %vm449, %v445, 0.0
    %451 = vadd.xlane.f32.xlu0 %v450
    %v452 = vpop.xlane.xlu0 %451
    %vm453 = vcmask 1045504
    %v454 = vsel %vm453, %v452, -inf
    %v455 = vmax.f32 %v448, %v454
    %v456 = vrot.slane %v455, 4
    %v457 = vmax.f32 %v455, %v456
    %v458 = vrot.slane %v457, 2
    %v459 = vmax.f32 %v457, %v458
    %v460 = vrot.slane %v459, 1
    %v461 = vmax.f32 %v459, %v460
    %v462 = vsub.f32 %v448, %v461
    %v463 = vsub.f32 %v452, %v461
    %v464 = vmul.f32 %v462, 1.442695
    %v465 = vpow.pop %v464
    %v466 = vmul.f32 %v463, 1.442695
    %v467 = vpow.pop %v466
    %v468 = vsel %vm453, %v467, 0.0
    %v469 = vadd.f32 %v465, %v468
    %v470 = vrot.slane %v469, 4
    %v471 = vadd.f32 %v469, %v470
    %v472 = vrot.slane %v471, 2
    %v473 = vadd.f32 %v471, %v472
    %v474 = vrot.slane %v473, 1
    %v475 = vadd.f32 %v473, %v474
    %v476 = vrcp.pop %v475
    %v477 = vmul.f32 %v475, %v476
    %v478 = vsub.f32 1.0, %v477
    %v479 = vmul.f32 %v476, %v478
    %v480 = vadd.f32 %v476, %v479
    %vm481 = vweird.f32 %v475
    %vm482 = vweird.f32 %v476
    %vm483 = vmor %vm481, %vm482
    %v484 = vsel %vm483, %v476, %v480
    %v485 = vand.u32 2147483647, %v475
    %vm486 = vcmp.eq.f32.partialorder %v485, 8.507059e+37
    %v487 = vand.u32 %v475, 2147483648
    %v488 = vor.u32 1.1754944e-38, %v487
    %v489 = vsel %vm486, %v488, %v484
    %v490 = vmul.f32 %v465, %v489
    %v491 = vmul.f32 %v467, %v489
    %v492 = vmul.f32 %v405, %v490
    %v493 = vmul.f32 %v406, %v491
    %v494 = vsel %vm66, %v492, 0.0
    %v495 = vsel %vm449, %v493, 0.0
    %v496 = vadd.f32 %v494, %v495
    %v497 = vrot.slane %v496, 4
    %v498 = vadd.f32 %v496, %v497
    %v499 = vrot.slane %v498, 2
    %v500 = vadd.f32 %v498, %v499
    %v501 = vrot.slane %v500, 1
    %v502 = vadd.f32 %v500, %v501
    %vm503 = vcmask 122880
    %504 = vst.msk [vmem:[#allocation2] sm:$0x1] %vm503, %v502
    %s505 = scalar_lea.vmem %s0, 16
    %v506 = vld [vmem:[%s505] sm:$0xff]
    %v507 = vld [vmem:[%s505 + $0x8] sm:$0x3f]
    %508 = vmatpush.msra.mxu0 0.0
    %509 = vmatpush.msra.mxu0 0.0
    %510 = vmatpush.msra.mxu0 0.0
    %511 = vmatpush.msra.mxu0 0.0
    %512 = vmatpush.msra.mxu0 0.0
    %513 = vmatpush.msra.mxu0 0.0
    %514 = vmatpush.msra.mxu0 0.0
    %515 = vmatpush.msra.mxu0 0.0
    %516 = vmatpush.msra.mxu0 0.0
    %517 = vmatpush.msra.mxu0 0.0
    %518 = vmatpush.msra.mxu0 0.0
    %519 = vmatpush.msra.mxu0 0.0
    %520 = vmatpush.msra.mxu0 0.0
    %521 = vmatpush.msra.mxu0 0.0
    %522 = vmatpush.msra.mxu0 %v43
    %523 = vmatpush.msra.mxu0 %v42
    %524 = vmatmul.f32.gmra.mxu0 %v411
    %v525 = vpop.f32.mrf.mxu0
    %v526 = vadd.f32 0.0, %v525
    %527 = vmatmul.f32.gmra.mxu0 %v414
    %v528 = vpop.f32.mrf.mxu0
    %v529 = vadd.f32 0.0, %v528
    %530 = vdwg.mxu0
    %v532 = vsel %vm93, %v506, 0
    %v535 = vsel %vm93, %v507, 0
    %537 = vmatpush.msra.mxu0 0.0
    %538 = vmatpush.msra.mxu0 0.0
    %539 = vmatpush.msra.mxu0 0.0
    %540 = vmatpush.msra.mxu0 0.0
    %541 = vmatpush.msra.mxu0 0.0
    %542 = vmatpush.msra.mxu0 0.0
    %543 = vmatpush.msra.mxu0 0.0
    %544 = vmatpush.msra.mxu0 0.0
    %545 = vmatpush.msra.mxu0 0.0
    %546 = vmatpush.msra.mxu0 0.0
    %547 = vmatpush.msra.mxu0 0.0
    %548 = vmatpush.msra.mxu0 0.0
    %549 = vmatpush.msra.mxu0 0.0
    %550 = vmatpush.msra.mxu0 %v29
    %551 = vmatpush.msra.mxu0 %v28
    %552 = vmatpush.msra.mxu0 %v27
    %553 = vmatmul.f32.gmra.mxu0 %v532
    %v554 = vpop.f32.mrf.mxu0
    %v555 = vadd.f32 %v526, %v554
    %556 = vmatmul.f32.gmra.mxu0 %v535
    %v557 = vpop.f32.mrf.mxu0
    %v558 = vadd.f32 %v529, %v557
    %559 = vdwg.mxu0
    %v560 = vadd.f32 %v555, %v124
    %v561 = vadd.f32 %v558, %v124
    %562 = vmatpush.msra.mxu0 0.0
    %563 = vmatpush.msra.mxu0 0.0
    %564 = vmatpush.msra.mxu0 0.0
    %565 = vmatpush.msra.mxu0 0.0
    %566 = vmatpush.msra.mxu0 0.0
    %567 = vmatpush.msra.mxu0 0.0
    %568 = vmatpush.msra.mxu0 0.0
    %569 = vmatpush.msra.mxu0 0.0
    %570 = vmatpush.msra.mxu0 0.0
    %571 = vmatpush.msra.mxu0 0.0
    %572 = vmatpush.msra.mxu0 0.0
    %573 = vmatpush.msra.mxu0 0.0
    %574 = vmatpush.msra.mxu0 0.0
    %575 = vmatpush.msra.mxu0 0.0
    %576 = vmatpush.msra.mxu0 %v46
    %577 = vmatpush.msra.mxu0 %v45
    %578 = vmatmul.f32.gmra.mxu0 %v411
    %v579 = vpop.f32.mrf.mxu0
    %v580 = vadd.f32 0.0, %v579
    %581 = vmatmul.f32.gmra.mxu0 %v414
    %v582 = vpop.f32.mrf.mxu0
    %v583 = vadd.f32 0.0, %v582
    %584 = vdwg.mxu0
    %585 = vmatpush.msra.mxu0 0.0
    %586 = vmatpush.msra.mxu0 0.0
    %587 = vmatpush.msra.mxu0 0.0
    %588 = vmatpush.msra.mxu0 0.0
    %589 = vmatpush.msra.mxu0 0.0
    %590 = vmatpush.msra.mxu0 0.0
    %591 = vmatpush.msra.mxu0 0.0
    %592 = vmatpush.msra.mxu0 0.0
    %593 = vmatpush.msra.mxu0 0.0
    %594 = vmatpush.msra.mxu0 0.0
    %595 = vmatpush.msra.mxu0 0.0
    %596 = vmatpush.msra.mxu0 0.0
    %597 = vmatpush.msra.mxu0 0.0
    %598 = vmatpush.msra.mxu0 %v33
    %599 = vmatpush.msra.mxu0 %v32
    %600 = vmatpush.msra.mxu0 %v31
    %601 = vmatmul.f32.gmra.mxu0 %v532
    %v602 = vpop.f32.mrf.mxu0
    %v603 = vadd.f32 %v580, %v602
    %604 = vmatmul.f32.gmra.mxu0 %v535
    %v605 = vpop.f32.mrf.mxu0
    %v606 = vadd.f32 %v583, %v605
    %607 = vdwg.mxu0
    %v608 = vadd.f32 %v603, %v175
    %v609 = vadd.f32 %v606, %v175
    %610 = vmatpush.msra.mxu0 0.0
    %611 = vmatpush.msra.mxu0 0.0
    %612 = vmatpush.msra.mxu0 0.0
    %613 = vmatpush.msra.mxu0 0.0
    %614 = vmatpush.msra.mxu0 0.0
    %615 = vmatpush.msra.mxu0 0.0
    %616 = vmatpush.msra.mxu0 0.0
    %617 = vmatpush.msra.mxu0 0.0
    %618 = vmatpush.msra.mxu0 0.0
    %619 = vmatpush.msra.mxu0 0.0
    %620 = vmatpush.msra.mxu0 0.0
    %621 = vmatpush.msra.mxu0 0.0
    %622 = vmatpush.msra.mxu0 0.0
    %623 = vmatpush.msra.mxu0 0.0
    %624 = vmatpush.msra.mxu0 %v49
    %625 = vmatpush.msra.mxu0 %v48
    %626 = vmatmul.f32.gmra.mxu0 %v411
    %v627 = vpop.f32.mrf.mxu0
    %v628 = vadd.f32 0.0, %v627
    %629 = vmatmul.f32.gmra.mxu0 %v414
    %v630 = vpop.f32.mrf.mxu0
    %v631 = vadd.f32 0.0, %v630
    %632 = vdwg.mxu0
    %633 = vmatpush.msra.mxu0 0.0
    %634 = vmatpush.msra.mxu0 0.0
    %635 = vmatpush.msra.mxu0 0.0
    %636 = vmatpush.msra.mxu0 0.0
    %637 = vmatpush.msra.mxu0 0.0
    %638 = vmatpush.msra.mxu0 0.0
    %639 = vmatpush.msra.mxu0 0.0
    %640 = vmatpush.msra.mxu0 0.0
    %641 = vmatpush.msra.mxu0 0.0
    %642 = vmatpush.msra.mxu0 0.0
    %643 = vmatpush.msra.mxu0 0.0
    %644 = vmatpush.msra.mxu0 0.0
    %645 = vmatpush.msra.mxu0 0.0
    %646 = vmatpush.msra.mxu0 %v37
    %647 = vmatpush.msra.mxu0 %v36
    %648 = vmatpush.msra.mxu0 %v35
    %649 = vmatmul.f32.gmra.mxu0 %v532
    %v650 = vpop.f32.mrf.mxu0
    %v651 = vadd.f32 %v628, %v650
    %652 = vmatmul.f32.gmra.mxu0 %v535
    %v653 = vpop.f32.mrf.mxu0
    %v654 = vadd.f32 %v631, %v653
    %655 = vdwg.mxu0
    %v656 = vadd.f32 %v651, %v226
    %v657 = vadd.f32 %v654, %v226
    %658 = vmatpush.msra.mxu0 0.0
    %659 = vmatpush.msra.mxu0 0.0
    %660 = vmatpush.msra.mxu0 0.0
    %661 = vmatpush.msra.mxu0 0.0
    %662 = vmatpush.msra.mxu0 0.0
    %663 = vmatpush.msra.mxu0 0.0
    %664 = vmatpush.msra.mxu0 0.0
    %665 = vmatpush.msra.mxu0 0.0
    %666 = vmatpush.msra.mxu0 0.0
    %667 = vmatpush.msra.mxu0 0.0
    %668 = vmatpush.msra.mxu0 0.0
    %669 = vmatpush.msra.mxu0 0.0
    %670 = vmatpush.msra.mxu0 0.0
    %671 = vmatpush.msra.mxu0 0.0
    %672 = vmatpush.msra.mxu0 %v52
    %673 = vmatpush.msra.mxu0 %v51
    %674 = vmatmul.f32.gmra.mxu0 %v411
    %v675 = vpop.f32.mrf.mxu0
    %v676 = vadd.f32 0.0, %v675
    %677 = vmatmul.f32.gmra.mxu0 %v414
    %v678 = vpop.f32.mrf.mxu0
    %v679 = vadd.f32 0.0, %v678
    %680 = vdwg.mxu0
    %681 = vmatpush.msra.mxu0 0.0
    %682 = vmatpush.msra.mxu0 0.0
    %683 = vmatpush.msra.mxu0 0.0
    %684 = vmatpush.msra.mxu0 0.0
    %685 = vmatpush.msra.mxu0 0.0
    %686 = vmatpush.msra.mxu0 0.0
    %687 = vmatpush.msra.mxu0 0.0
    %688 = vmatpush.msra.mxu0 0.0
    %689 = vmatpush.msra.mxu0 0.0
    %690 = vmatpush.msra.mxu0 0.0
    %691 = vmatpush.msra.mxu0 0.0
    %692 = vmatpush.msra.mxu0 0.0
    %693 = vmatpush.msra.mxu0 0.0
    %694 = vmatpush.msra.mxu0 %v41
    %695 = vmatpush.msra.mxu0 %v40
    %696 = vmatpush.msra.mxu0 %v39
    %697 = vmatmul.f32.gmra.mxu0 %v532
    %v698 = vpop.f32.mrf.mxu0
    %v699 = vadd.f32 %v676, %v698
    %700 = vmatmul.f32.gmra.mxu0 %v535
    %v701 = vpop.f32.mrf.mxu0
    %v702 = vadd.f32 %v679, %v701
    %703 = vdwg.mxu0
    %v704 = vadd.f32 %v699, %v277
    %v705 = vadd.f32 %v702, %v277
    %v706 = vxor.u32 %v560, 2147483648
    %v707 = vxor.u32 %v561, 2147483648
    %v708 = vmul.f32 %v706, 1.442695
    %v709 = vpow.pop %v708
    %v710 = vmul.f32 %v707, 1.442695
    %v711 = vpow.pop %v710
    %v712 = vadd.f32 %v709, 1.0
    %v713 = vadd.f32 %v711, 1.0
    %v714 = vrcp.pop %v712
    %v715 = vmul.f32 %v712, %v714
    %v716 = vsub.f32 1.0, %v715
    %v717 = vmul.f32 %v714, %v716
    %v718 = vadd.f32 %v714, %v717
    %vm719 = vweird.f32 %v712
    %vm720 = vweird.f32 %v714
    %vm721 = vmor %vm719, %vm720
    %v722 = vsel %vm721, %v714, %v718
    %v723 = vand.u32 2147483647, %v712
    %vm724 = vcmp.eq.f32.partialorder %v723, 8.507059e+37
    %v725 = vand.u32 %v712, 2147483648
    %v726 = vor.u32 1.1754944e-38, %v725
    %v727 = vsel %vm724, %v726, %v722
    %v728 = vmul.f32 1.0, %v727
    %v729 = vrcp.pop %v713
    %v730 = vmul.f32 %v713, %v729
    %v731 = vsub.f32 1.0, %v730
    %v732 = vmul.f32 %v729, %v731
    %v733 = vadd.f32 %v729, %v732
    %vm734 = vweird.f32 %v713
    %vm735 = vweird.f32 %v729
    %vm736 = vmor %vm734, %vm735
    %v737 = vsel %vm736, %v729, %v733
    %v738 = vand.u32 2147483647, %v713
    %vm739 = vcmp.eq.f32.partialorder %v738, 8.507059e+37
    %v740 = vand.u32 %v713, 2147483648
    %v741 = vor.u32 1.1754944e-38, %v740
    %v742 = vsel %vm739, %v741, %v737
    %v743 = vmul.f32 1.0, %v742
    %v744 = vxor.u32 %v608, 2147483648
    %v745 = vxor.u32 %v609, 2147483648
    %v746 = vmul.f32 %v744, 1.442695
    %v747 = vpow.pop %v746
    %v748 = vmul.f32 %v745, 1.442695
    %v749 = vpow.pop %v748
    %v750 = vadd.f32 %v747, 1.0
    %v751 = vadd.f32 %v749, 1.0
    %v752 = vrcp.pop %v750
    %v753 = vmul.f32 %v750, %v752
    %v754 = vsub.f32 1.0, %v753
    %v755 = vmul.f32 %v752, %v754
    %v756 = vadd.f32 %v752, %v755
    %vm757 = vweird.f32 %v750
    %vm758 = vweird.f32 %v752
    %vm759 = vmor %vm757, %vm758
    %v760 = vsel %vm759, %v752, %v756
    %v761 = vand.u32 2147483647, %v750
    %vm762 = vcmp.eq.f32.partialorder %v761, 8.507059e+37
    %v763 = vand.u32 %v750, 2147483648
    %v764 = vor.u32 1.1754944e-38, %v763
    %v765 = vsel %vm762, %v764, %v760
    %v766 = vmul.f32 1.0, %v765
    %v767 = vrcp.pop %v751
    %v768 = vmul.f32 %v751, %v767
    %v769 = vsub.f32 1.0, %v768
    %v770 = vmul.f32 %v767, %v769
    %v771 = vadd.f32 %v767, %v770
    %vm772 = vweird.f32 %v751
    %vm773 = vweird.f32 %v767
    %vm774 = vmor %vm772, %vm773
    %v775 = vsel %vm774, %v767, %v771
    %v776 = vand.u32 2147483647, %v751
    %vm777 = vcmp.eq.f32.partialorder %v776, 8.507059e+37
    %v778 = vand.u32 %v751, 2147483648
    %v779 = vor.u32 1.1754944e-38, %v778
    %v780 = vsel %vm777, %v779, %v775
    %v781 = vmul.f32 1.0, %v780
    %v782 = vtanh.pop %v656
    %v783 = vtanh.pop %v657
    %v784 = vxor.u32 %v704, 2147483648
    %v785 = vxor.u32 %v705, 2147483648
    %v786 = vmul.f32 %v784, 1.442695
    %v787 = vpow.pop %v786
    %v788 = vmul.f32 %v785, 1.442695
    %v789 = vpow.pop %v788
    %v790 = vadd.f32 %v787, 1.0
    %v791 = vadd.f32 %v789, 1.0
    %v792 = vrcp.pop %v790
    %v793 = vmul.f32 %v790, %v792
    %v794 = vsub.f32 1.0, %v793
    %v795 = vmul.f32 %v792, %v794
    %v796 = vadd.f32 %v792, %v795
    %vm797 = vweird.f32 %v790
    %vm798 = vweird.f32 %v792
    %vm799 = vmor %vm797, %vm798
    %v800 = vsel %vm799, %v792, %v796
    %v801 = vand.u32 2147483647, %v790
    %vm802 = vcmp.eq.f32.partialorder %v801, 8.507059e+37
    %v803 = vand.u32 %v790, 2147483648
    %v804 = vor.u32 1.1754944e-38, %v803
    %v805 = vsel %vm802, %v804, %v800
    %v806 = vmul.f32 1.0, %v805
    %v807 = vrcp.pop %v791
    %v808 = vmul.f32 %v791, %v807
    %v809 = vsub.f32 1.0, %v808
    %v810 = vmul.f32 %v807, %v809
    %v811 = vadd.f32 %v807, %v810
    %vm812 = vweird.f32 %v791
    %vm813 = vweird.f32 %v807
    %vm814 = vmor %vm812, %vm813
    %v815 = vsel %vm814, %v807, %v811
    %v816 = vand.u32 2147483647, %v791
    %vm817 = vcmp.eq.f32.partialorder %v816, 8.507059e+37
    %v818 = vand.u32 %v791, 2147483648
    %v819 = vor.u32 1.1754944e-38, %v818
    %v820 = vsel %vm817, %v819, %v815
    %v821 = vmul.f32 1.0, %v820
    %v822 = vmul.f32 %v766, %v401
    %v823 = vmul.f32 %v781, %v402
    %v824 = vmul.f32 %v728, %v782
    %v825 = vmul.f32 %v743, %v783
    %v826 = vadd.f32 %v822, %v824
    %v827 = vadd.f32 %v823, %v825
    %v828 = vtanh.pop %v826
    %v829 = vtanh.pop %v827
    %v830 = vmul.f32 %v806, %v828
    %v831 = vmul.f32 %v821, %v829
    %v833 = vsel %vm66, %v830, 0
    %v836 = vsel %vm66, %v831, 0
    %838 = vmatpush.msra.mxu0 0.0
    %839 = vmatpush.msra.mxu0 0.0
    %840 = vmatpush.msra.mxu0 0.0
    %841 = vmatpush.msra.mxu0 0.0
    %842 = vmatpush.msra.mxu0 0.0
    %843 = vmatpush.msra.mxu0 0.0
    %844 = vmatpush.msra.mxu0 0.0
    %845 = vmatpush.msra.mxu0 0.0
    %846 = vmatpush.msra.mxu0 0.0
    %847 = vmatpush.msra.mxu0 0.0
    %848 = vmatpush.msra.mxu0 0.0
    %849 = vmatpush.msra.mxu0 0.0
    %850 = vmatpush.msra.mxu0 0.0
    %851 = vmatpush.msra.mxu0 0.0
    %852 = vmatpush.msra.mxu0 %v61
    %853 = vmatpush.msra.mxu0 %v60
    %854 = vmatmul.f32.gmra.mxu0 %v833
    %v855 = vpop.f32.mrf.mxu0
    %v856 = vadd.f32 %v408, %v855
    %857 = vmatmul.f32.gmra.mxu0 %v836
    %v858 = vpop.f32.mrf.mxu0
    %v859 = vadd.f32 %v408, %v858
    %860 = vdwg.mxu0
    %v861 = vtanh.pop %v856
    %v862 = vtanh.pop %v859
    %v863 = vmul.f32 %v861, %v442
    %v864 = vmul.f32 %v862, %v442
    %v865 = vsel %vm66, %v863, 0.0
    %866 = vadd.xlane.f32.xlu0 %v865
    %v867 = vpop.xlane.xlu0 %866
    %v868 = vsel %vm449, %v864, 0.0
    %869 = vadd.xlane.f32.xlu0 %v868
    %v870 = vpop.xlane.xlu0 %869
    %v871 = vsel %vm453, %v870, -inf
    %v872 = vmax.f32 %v867, %v871
    %v873 = vrot.slane %v872, 4
    %v874 = vmax.f32 %v872, %v873
    %v875 = vrot.slane %v874, 2
    %v876 = vmax.f32 %v874, %v875
    %v877 = vrot.slane %v876, 1
    %v878 = vmax.f32 %v876, %v877
    %v879 = vsub.f32 %v867, %v878
    %v880 = vsub.f32 %v870, %v878
    %v881 = vmul.f32 %v879, 1.442695
    %v882 = vpow.pop %v881
    %v883 = vmul.f32 %v880, 1.442695
    %v884 = vpow.pop %v883
    %v885 = vsel %vm453, %v884, 0.0
    %v886 = vadd.f32 %v882, %v885
    %v887 = vrot.slane %v886, 4
    %v888 = vadd.f32 %v886, %v887
    %v889 = vrot.slane %v888, 2
    %v890 = vadd.f32 %v888, %v889
    %v891 = vrot.slane %v890, 1
    %v892 = vadd.f32 %v890, %v891
    %v893 = vrcp.pop %v892
    %v894 = vmul.f32 %v892, %v893
    %v895 = vsub.f32 1.0, %v894
    %v896 = vmul.f32 %v893, %v895
    %v897 = vadd.f32 %v893, %v896
    %vm898 = vweird.f32 %v892
    %vm899 = vweird.f32 %v893
    %vm900 = vmor %vm898, %vm899
    %v901 = vsel %vm900, %v893, %v897
    %v902 = vand.u32 2147483647, %v892
    %vm903 = vcmp.eq.f32.partialorder %v902, 8.507059e+37
    %v904 = vand.u32 %v892, 2147483648
    %v905 = vor.u32 1.1754944e-38, %v904
    %v906 = vsel %vm903, %v905, %v901
    %v907 = vmul.f32 %v882, %v906
    %v908 = vmul.f32 %v884, %v906
    %v909 = vmul.f32 %v830, %v907
    %v910 = vmul.f32 %v831, %v908
    %v911 = vsel %vm66, %v909, 0.0
    %v912 = vsel %vm449, %v910, 0.0
    %v913 = vadd.f32 %v911, %v912
    %v914 = vrot.slane %v913, 4
    %v915 = vadd.f32 %v913, %v914
    %v916 = vrot.slane %v915, 2
    %v917 = vadd.f32 %v915, %v916
    %v918 = vrot.slane %v917, 1
    %v919 = vadd.f32 %v917, %v918
    %920 = vst.msk [vmem:[#allocation2 + $0x1] sm:$0x1] %vm503, %v919
    // Predicated region
    $region30: #{tpu_custom_call.1} parent=1 // pred_check
      _
    $region31: #{tpu_custom_call.1} parent=1 // pred_check_branch
      %922 = sbr.rel (0) target = $region33
    $region32: #{tpu_custom_call.1} parent=1 // pred_region
      %924 = vsyncadd [#allocation3], 0
      %s926 = sshll.u32 [#allocation2], 4
      %s927 = int_to_ptr.vmem [resolvable:$true] %s926
      %s928 = sshll.u32 %s7, 4
      %s929 = int_to_ptr.hbm [resolvable:$true] %s928
      %931 = dma.vmem_to_hbm [thread:$0]  %s927, 32, %s929, [#allocation3]
    $region33: #{tpu_custom_call.1} parent=1 // pred_fallthru
      _
    // Predicated region
    $region34: #{tpu_custom_call.1} parent=1 // pred_check
      _
    $region35: #{tpu_custom_call.1} parent=1 // pred_check_branch
      %933 = sbr.rel (0) target = $region37
    $region36: #{tpu_custom_call.1} parent=1 // pred_region
      %935 = dma.done [#allocation3], 32
    $region37: #{tpu_custom_call.1} parent=1 // pred_fallthru
      _
    %936 = vsyncpa [#allocation3], 1

</llo_original>
